<compile_context>
chip_gen: v7x
topology: tpu7x:2x2x1
jax: 0.10.0
libtpu: 0.0.40
codegen_flags: <defaults>
</compile_context>

<pallas_src>
import functools
import math

import jax
import jax.numpy as jnp
from jax import lax
from jax.experimental import pallas as pl
from jax.experimental.pallas import tpu as pltpu

_LANE = 128
_MIB = 1024 * 1024
# Problems below this many matmul FLOPs are left to XLA (fusion beats a
# single-grid-point pallas_call + launch/DMA overhead at this size).
_PALLAS_MIN_FLOPS = 1 << 26
# f32 inputs at or above this many FLOPs default to bf16 MXU compute
# (accumulation stays f32 in VMEM scratch).
_BF16_AUTO_FLOPS = 1 << 27


def _round_up(x: int, m: int) -> int:
    return ((x + m - 1) // m) * m


def _cdiv(a: int, b: int) -> int:
    return (a + b - 1) // b


@functools.lru_cache(maxsize=None)
def _vmem_capacity_bytes() -> int:
    """Per-TensorCore VMEM capacity; conservative fallback = v7x (64 MiB)."""
    try:
        cap = int(pltpu.get_tpu_info().vmem_capacity_bytes)
        if cap > 0:
            return cap
    except Exception:
        pass
    return 64 * _MIB


def _largest_dividing_tile(dim: int, cap: int, align: int):
    """Largest multiple of `align` <= cap that divides `dim`, else None."""
    t = (cap // align) * align
    while t >= align:
        if dim % t == 0:
            return t
        t -= align
    return None


def _apply_activation(y, activation):
    if activation is None:
        return y
    if activation == "relu":
        return jnp.maximum(y, 0.0)
    if activation == "gelu":
        # exact erf form to match PyTorch nn.GELU default
        return jax.nn.gelu(y, approximate=False)
    raise ValueError(f"unsupported activation: {activation}")


# --------------------------------------------------------------------------
# Kernels
# --------------------------------------------------------------------------
def _linear_single_k_kernel(x_ref, w_ref, b_ref, o_ref, *, activation, precision):
    """K fits in one tile: dot -> +bias -> activation -> store (no scratch)."""
    y = jnp.dot(x_ref[...], w_ref[...],
                preferred_element_type=jnp.float32, precision=precision)
    y = y + b_ref[...].astype(jnp.float32)          # bias broadcast (1, tn)
    o_ref[...] = _apply_activation(y, activation).astype(o_ref.dtype)


def _linear_multi_k_kernel(x_ref, w_ref, b_ref, o_ref, acc_ref, *,
                           activation, precision):
    """Output-stationary K reduction with f32 accumulator in VMEM scratch."""
    k = pl.program_id(2)
    partial = jnp.dot(x_ref[...], w_ref[...],
                      preferred_element_type=jnp.float32, precision=precision)

    @pl.when(k == 0)
    def _():
        # Direct write fused with the bias: avoids zero-init + read-modify-write
        # on the first step and drops the epilogue bias add.
        acc_ref[...] = partial + b_ref[...].astype(jnp.float32)

    @pl.when(k > 0)
    def _():
        acc_ref[...] += partial

    @pl.when(k == pl.num_programs(2) - 1)
    def _():
        o_ref[...] = _apply_activation(acc_ref[...], activation).astype(o_ref.dtype)


# --------------------------------------------------------------------------
# Wrapper
# --------------------------------------------------------------------------
def linear_forward(
    x,
    weight_t,
    bias,
    activation="relu",
    *,
    compute_dtype="auto",
    out_dtype=None,
    tm=None,
    tn=None,
    tk=None,
    force_pallas=False,
):
    """y = activation(x @ weight_t + bias); dropout is identity (inference).

    x: (..., K) channels-last; weight_t: (K, N) = W^T; bias: (N,).
    compute_dtype: "auto" (default; bf16 MXU compute for large f32 problems),
        None (keep input dtype), or an explicit dtype (e.g. jnp.bfloat16 /
        jnp.float32).  Accumulation is always f32.
    out_dtype: output dtype (default: x.dtype).  Use bf16 to halve writeback
        bytes when downstream accepts it.
    """
    if activation not in (None, "relu", "gelu"):
        raise ValueError(f"unsupported activation: {activation}")

    *lead, K = x.shape
    Kw, N = weight_t.shape
    if Kw != K:
        raise ValueError(f"weight_t first dim {Kw} != input channels {K}")
    M = int(math.prod(lead)) if lead else 1
    out_dtype = out_dtype if out_dtype is not None else x.dtype
    flops = 2 * M * K * N

    # Compute-dtype policy: bf16 MXU path is the deliberate default for large
    # f32 problems (f32 accumulation keeps accuracy); otherwise keep the input
    # dtype and make the f32 MXU path intentional with precision=HIGHEST.
    if isinstance(compute_dtype, str):
        if compute_dtype != "auto":
            raise ValueError(f"unknown compute_dtype: {compute_dtype}")
        compute_dtype = (
            jnp.bfloat16
            if (x.dtype == jnp.float32 and flops >= _BF16_AUTO_FLOPS)
            else None
        )

    x2 = x.reshape(M, K)
    w = weight_t
    if compute_dtype is not None:
        x2 = x2.astype(compute_dtype)
        w = w.astype(compute_dtype)
    precision = lax.Precision.HIGHEST if x2.dtype == jnp.float32 else None

    # Tiny/medium problems: let XLA fuse matmul + bias + activation.
    if not force_pallas and flops < _PALLAS_MIN_FLOPS:
        y = jnp.dot(x2, w, preferred_element_type=jnp.float32, precision=precision)
        y = _apply_activation(y + bias.astype(jnp.float32), activation)
        return y.astype(out_dtype).reshape(*lead, N)

    x_bytes = jnp.dtype(x2.dtype).itemsize
    w_bytes = jnp.dtype(w.dtype).itemsize
    o_bytes = jnp.dtype(out_dtype).itemsize
    b2 = bias.astype(jnp.float32).reshape(1, N)

    # ---- generation-aware tile caps --------------------------------------
    vmem_cap = _vmem_capacity_bytes()
    big_vmem = vmem_cap >= 100 * _MIB      # v5e / v6e: 128 MiB; v7x: 64 MiB/TC
    cap_mn = 1024 if big_vmem else 512
    cap_k = 2048 if x_bytes <= 2 else 1024  # bf16 K-tiles can be 2x deeper

    # ---- K tiling (zero-padding only where the reduction requires it) ----
    if tk is None:
        if K <= cap_k:
            tk = K                          # single-k fast path, no padding
        else:
            tk = (_largest_dividing_tile(K, cap_k, 256)
                  or _largest_dividing_tile(K, cap_k, _LANE)
                  or cap_k)
    K_pad = _round_up(K, tk)
    if K_pad != K:
        # Only the reduction axis must be zero padded for correctness.
        x2 = jnp.pad(x2, ((0, 0), (0, K_pad - K)))
        w = jnp.pad(w, ((0, K_pad - K), (0, 0)))
    grid_k = K_pad // tk

    # ---- M / N tiling: full-dim blocks when they fit, otherwise aligned
    #      tiles with masked partial edge blocks (no jnp.pad round trips) ----
    if tm is None:
        tm = M if M <= cap_mn else cap_mn   # cap is a multiple of 8
    if tn is None:
        tn = N if N <= cap_mn else cap_mn   # cap is a multiple of 256
    grid_m = _cdiv(M, tm)
    grid_n = _cdiv(N, tn)

    # v7x has two TensorCores: keep the parallel grid >= 2 steps so both are fed.
    if not big_vmem and grid_m * grid_n == 1:
        if tn % 256 == 0:
            tn //= 2
        elif tm % 16 == 0:
            tm //= 2
        grid_m = _cdiv(M, tm)
        grid_n = _cdiv(N, tn)

    multi_k = grid_k > 1
    # Weight-streaming regime (tiny M, several k steps): deepen weight
    # buffering so its DMA is hidden (biggest win on v5e's lower HBM BW).
    deep_w = multi_k and grid_m == 1

    # ---- specs / kernel selection -----------------------------------------
    if multi_k:
        kernel = functools.partial(_linear_multi_k_kernel,
                                   activation=activation, precision=precision)
        grid = (grid_m, grid_n, grid_k)
        w_spec = pl.BlockSpec((tk, tn), lambda i, j, k: (k, j))
        if deep_w:
            try:
                w_spec = pl.BlockSpec((tk, tn), lambda i, j, k: (k, j),
                                      pipeline_mode=pl.Buffered(3))
            except Exception:
                deep_w = False
        in_specs = [
            pl.BlockSpec((tm, tk), lambda i, j, k: (i, k)),   # x tile
            w_spec,                                           # w tile
            pl.BlockSpec((1, tn), lambda i, j, k: (0, j)),    # bias tile
        ]
        out_spec = pl.BlockSpec((tm, tn), lambda i, j, k: (i, j))
        scratch = [pltpu.VMEM((tm, tn), jnp.float32)]
        dims = ("parallel", "parallel", "arbitrary")
    else:
        kernel = functools.partial(_linear_single_k_kernel,
                                   activation=activation, precision=precision)
        grid = (grid_m, grid_n)
        in_specs = [
            pl.BlockSpec((tm, tk), lambda i, j: (i, 0)),
            pl.BlockSpec((tk, tn), lambda i, j: (0, j)),
            pl.BlockSpec((1, tn), lambda i, j: (0, j)),
        ]
        out_spec = pl.BlockSpec((tm, tn), lambda i, j: (i, j))
        scratch = []
        dims = ("parallel", "parallel")

    # ---- VMEM budget / cost hint ------------------------------------------
    n_wbuf = 3 if deep_w else 2
    acc_bytes = tm * tn * 4 if multi_k else 0
    vmem_est = (2 * tm * tk * x_bytes + n_wbuf * tk * tn * w_bytes
                + 2 * tn * 4 + 2 * tm * tn * o_bytes + acc_bytes)
    vmem_limit = min(max(int(vmem_est * 1.3), 32 * _MIB), (vmem_cap * 3) // 4)

    cost = pl.CostEstimate(
        flops=2 * M * N * K_pad,
        transcendentals=(M * N if activation == "gelu" else 0),
        bytes_accessed=(M * K_pad * x_bytes + K_pad * N * w_bytes
                        + N * 4 + M * N * o_bytes),
    )

    out = pl.pallas_call(
        kernel,
        out_shape=jax.ShapeDtypeStruct((M, N), out_dtype),
        grid_spec=pltpu.PrefetchScalarGridSpec(
            num_scalar_prefetch=0,
            grid=grid,
            in_specs=in_specs,
            out_specs=out_spec,
            scratch_shapes=scratch,
        ),
        compiler_params=pltpu.CompilerParams(
            dimension_semantics=dims,
            vmem_limit_bytes=vmem_limit,
        ),
        cost_estimate=cost,
    )(x2, w, b2)

    return out.reshape(*lead, N)


# --------------------------------------------------------------------------
# Self-test
# --------------------------------------------------------------------------
if __name__ == "__main__":
    key = jax.random.PRNGKey(0)
    HI = lax.Precision.HIGHEST

    # --- Test 1: module-sized shapes (Pallas single-k path), relu, f32 ---
    in_c, out_c = 32, 64
    k1, k2, k3, k4 = jax.random.split(key, 4)
    x = jax.random.normal(k1, (2, 8, in_c), dtype=jnp.float32)
    bound = 1.0 / (in_c ** 0.5)
    w_t = jax.random.uniform(k2, (in_c, out_c), minval=-bound, maxval=bound,
                             dtype=jnp.float32)
    b = jax.random.uniform(k3, (out_c,), minval=-bound, maxval=bound,
                           dtype=jnp.float32)

    y = linear_forward(x, w_t, b, activation="relu",
                       compute_dtype=jnp.float32, force_pallas=True)
    jax.block_until_ready(y)
    y_ref = jnp.maximum(jnp.dot(x, w_t, precision=HI) + b, 0.0)
    assert y.shape == (2, 8, out_c)
    assert jnp.allclose(y, y_ref, atol=1e-4), "relu mismatch vs reference"

    # --- Test 2: multi-k accumulation path (tk override), exact-erf gelu ---
    in2, out2 = 256, 384
    k5, k6, k7 = jax.random.split(k4, 3)
    x_l = jax.random.normal(k5, (2, 128, in2), dtype=jnp.float32)
    bound2 = 1.0 / (in2 ** 0.5)
    w_l = jax.random.uniform(k6, (in2, out2), minval=-bound2, maxval=bound2,
                             dtype=jnp.float32)
    b_l = jax.random.uniform(k7, (out2,), minval=-bound2, maxval=bound2,
                             dtype=jnp.float32)

    y2 = linear_forward(x_l, w_l, b_l, activation="gelu",
                        compute_dtype=jnp.float32, tk=128, force_pallas=True)
    jax.block_until_ready(y2)
    y2_ref = jax.nn.gelu(jnp.dot(x_l, w_l, precision=HI) + b_l,
                         approximate=False)
    assert y2.shape == (2, 128, out2)
    assert jnp.allclose(y2, y2_ref, atol=1e-4, rtol=1e-4), "gelu mismatch"

    # --- Test 3: explicit bf16 MXU compute (f32 accumulation), no act ---
    y3 = linear_forward(x_l, w_l, b_l, activation=None,
                        compute_dtype=jnp.bfloat16, force_pallas=True)
    jax.block_until_ready(y3)
    y3_ref = jnp.dot(x_l, w_l, precision=HI) + b_l
    assert float(jnp.max(jnp.abs(y3 - y3_ref))) < 5e-2, "bf16 mismatch"

    # --- Test 4: unaligned M / N with partial edge blocks (masked writes) ---
    in4, out4 = 96, 200
    k8, k9, k10 = jax.random.split(k7, 3)
    x_u = jax.random.normal(k8, (3, 17, in4), dtype=jnp.float32)   # M = 51
    bound4 = 1.0 / (in4 ** 0.5)
    w_u = jax.random.uniform(k9, (in4, out4), minval=-bound4, maxval=bound4,
                             dtype=jnp.float32)
    b_u = jax.random.uniform(k10, (out4,), minval=-bound4, maxval=bound4,
                             dtype=jnp.float32)

    y4 = linear_forward(x_u, w_u, b_u, activation="relu",
                        compute_dtype=jnp.float32, tm=32, tn=128,
                        force_pallas=True)
    jax.block_until_ready(y4)
    y4_ref = jnp.maximum(jnp.dot(x_u, w_u, precision=HI) + b_u, 0.0)
    assert y4.shape == (3, 17, out4)
    assert jnp.allclose(y4, y4_ref, atol=1e-4), "partial-block mismatch"

    print("KERNEL_OK")
</pallas_src>

<mosaic_0001>
module attributes {stable_mosaic.version = 11 : i64} {
  func.func @_linear_single_k_kernel(%arg0: i32, %arg1: i32, %arg2: memref<8x32xf32, #tpu.memory_space<vmem>>, %arg3: memref<32x64xf32, #tpu.memory_space<vmem>>, %arg4: memref<1x64xf32, #tpu.memory_space<vmem>>, %arg5: memref<8x64xf32, #tpu.memory_space<vmem>>) attributes {dimension_semantics = [#tpu.dimension_semantics<parallel>, #tpu.dimension_semantics<parallel>], iteration_bounds = array<i64: 2, 1>, scalar_prefetch = 0 : i64, scratch_operands = 0 : i64, tpu.core_type = #tpu.core_type<tc>, window_params = [{transform_indices = @transform_0, window_bounds = array<i64: 8, 32>}, {transform_indices = @transform_1, window_bounds = array<i64: 32, 64>}, {transform_indices = @transform_2, window_bounds = array<i64: 1, 64>}, {transform_indices = @transform_3, window_bounds = array<i64: 8, 64>}]} {
    %c0 = arith.constant 0 : index
    %c0_0 = arith.constant 0 : index
    %0 = vector.load %arg2[%c0, %c0_0] : memref<8x32xf32, #tpu.memory_space<vmem>>, vector<8x32xf32>
    %c0_1 = arith.constant 0 : index
    %c0_2 = arith.constant 0 : index
    %1 = vector.load %arg3[%c0_1, %c0_2] : memref<32x64xf32, #tpu.memory_space<vmem>>, vector<32x64xf32>
    %cst = arith.constant dense<0.000000e+00> : vector<8x64xf32>
    %2 = tpu.matmul %0, %1, %cst {dimension_numbers = #tpu.dot_dimension_numbers<[1], [0], [0], [1], [0, 0, 1, 1], [], []>, precision = #tpu.contract_precision<fp32>} : vector<8x32xf32>, vector<32x64xf32>, vector<8x64xf32> -> vector<8x64xf32>
    %c0_3 = arith.constant 0 : index
    %c0_4 = arith.constant 0 : index
    %3 = vector.load %arg4[%c0_3, %c0_4] : memref<1x64xf32, #tpu.memory_space<vmem>>, vector<1x64xf32>
    %4 = vector.broadcast %3 : vector<1x64xf32> to vector<8x64xf32>
    %5 = arith.addf %2, %4 : vector<8x64xf32>
    %cst_5 = arith.constant 0.000000e+00 : f32
    %6 = vector.broadcast %cst_5 : f32 to vector<8x64xf32>
    %7 = arith.maximumf %5, %6 : vector<8x64xf32>
    %c0_6 = arith.constant 0 : index
    %c0_7 = arith.constant 0 : index
    %8 = vector.load %arg5[%c0_6, %c0_7] : memref<8x64xf32, #tpu.memory_space<vmem>>, vector<8x64xf32>
    tpu.vector_store %arg5[%c0_6, %c0_7], %7 {strides = array<i32>} : memref<8x64xf32, #tpu.memory_space<vmem>>, vector<8x64xf32>,
    return
  }
  func.func @transform_0(%arg0: i32, %arg1: i32) -> (i32, i32) {
    %c0_i32 = arith.constant 0 : i32
    %c0_i32_0 = arith.constant 0 : i32
    return %arg0, %c0_i32 : i32, i32
  }
  func.func @transform_1(%arg0: i32, %arg1: i32) -> (i32, i32) {
    %c0_i32 = arith.constant 0 : i32
    %c0_i32_0 = arith.constant 0 : i32
    return %c0_i32, %arg1 : i32, i32
  }
  func.func @transform_2(%arg0: i32, %arg1: i32) -> (i32, i32) {
    %c0_i32 = arith.constant 0 : i32
    %c0_i32_0 = arith.constant 0 : i32
    return %c0_i32, %arg1 : i32, i32
  }
  func.func @transform_3(%arg0: i32, %arg1: i32) -> (i32, i32) {
    %c0_i32 = arith.constant 0 : i32
    return %arg0, %arg1 : i32, i32
  }
}

</mosaic_0001>

<llo_original>
// kernel: tpu_custom_call.1
$region0: #{tpu_custom_call.1}
  #allocation0 [shape = 'u32[]', space=smem, size = 0x4, offset = 0x4, fixed_abs, tag = 'smem constant byte address 0x4 - core index']
  #allocation1 [shape = 'u32[144,128]{1,0:T(1,128)}', space=vmem, size = 0x12000, scoped, tag = 'internal scratch']
  %s0 = inlined_call_operand.hbm [shape: f32[16,32], index: 0, kind: input, shape index: {}]
  %s1 = inlined_call_operand.hbm [shape: f32[32,64], index: 1, kind: input, shape index: {}]
  %s2 = inlined_call_operand.vmem [shape: f32[1,64], index: 2, kind: input, shape index: {}]
  %s3 = inlined_call_operand.hbm [shape: f32[16,64], index: 3, kind: output, shape index: {}]
  %s4 = sld [smem:[#allocation0]]
  $region53: #{tpu_custom_call.1} parent=0
    _
  %s6 = ssub.s32 1, %s4
  %s7 = scalar_select 0, %s6, %s4
  $region1: #{tpu_custom_call.1} parent=0
    #allocation2 [shape = 'u8[8192]{0}', space=vmem, size = 0x2000, scoped, tag = 'input window, operand 0']
    #allocation3 [shape = 's32[2]{0}', space=sflag, size = 0x8, scoped, tag = 'scoped memory for tpu_custom_call.1']
    #allocation4 [shape = 's32[2]{0}', space=sflag, size = 0x8, scoped, tag = 'scoped memory for tpu_custom_call.1']
    #allocation5 [shape = 'u8[16384]{0}', space=vmem, size = 0x4000, scoped, tag = 'input window, operand 1, single buffered']
    #allocation6 [shape = 's32[1]{0}', space=sflag, size = 0x4, scoped, tag = 'scoped memory for tpu_custom_call.1']
    #allocation7 [shape = 'u8[8192]{0}', space=vmem, size = 0x2000, scoped, tag = 'output window, operand 0']
    %8 = vsyncpa [#allocation3], 0
    %s9 = scalar_lea.sflag [#allocation3], 1
    %10 = vsyncpa %s9, 0
    %11 = vsyncpa [#allocation6], 0
    %12 = vsyncpa [#allocation4], 0
    %s13 = scalar_lea.sflag [#allocation4], 1
    %14 = vsyncpa %s13, 0
    loop: start=0, step=1, limit=4
    $region2: #{tpu_custom_call.1} parent=1 // loop_pre_header
      _
    $region3: #{tpu_custom_call.1} parent=1 // loop_header
      %s16 = sphi 0, %s20
      %p17 = scmp.ge.s32.totalorder %s16, 4
      %s23 = sphi 0, %s35
      %s24 = sphi 0, %s31
      %s25 = sphi 0, %s23
      %s26 = sphi 0, %s24
      %s27 = sphi 0, %s25
      %s28 = sphi 0, %s26
      %s38 = sphi 0, %s40
      %s41 = sphi 0, %s38
      %s42 = sphi 0, %s41
      %s58 = sphi 0, %s42
      %s64 = sphi 0, %s66
      %s67 = sphi 0, %s64
      %s68 = sphi 0, %s67
      %s84 = sphi 0, %s68
      %s90 = sphi 0, %s92
      %s93 = sphi 0, %s90
      %s94 = sphi 0, %s93
      %s110 = sphi 0, %s94
      %s118 = sphi 0, %s120
      %s121 = sphi 0, %s118
      %s122 = sphi 0, %s121
      %s138 = sphi 0, %s122
    $region4: #{tpu_custom_call.1} parent=1 // loop_header_branch
      %19 = sbr.rel (%p17) target = $region8
    $region5: #{tpu_custom_call.1} parent=1 // loop_body
      %s21 = ssub.s32 %s16, 1
      %s22 = ssub.s32 %s16, 2
      %s29 = sadd.s32 1, %s24
      %p30 = scmp.ge.s32.totalorder %s29, 1
      %s31 = scalar_select %p30, 0, %s29
      %s32 = sadd.s32 1, %s23
      %s33 = scalar_select %p30, %s32, %s23
      %p34 = scmp.ge.s32.totalorder %s33, 2
      %s35 = scalar_select %p34, 0, %s33
      %s36 = ssub.s32 %s23, %s35
      %p37 = scmp.eq.s32.totalorder %s36, 0
      %s39 = sadd.s32 %s38, 1
      %s40 = scalar_select %p37, %s38, %s39
      %p43 = pneg %p37
      %p44 = scmp.eq.s32.totalorder %s16, 1
      %p45 = por %p43, %p44
      %p46 = scmp.ne.s32.totalorder %s38, %s41
      %p47 = scmp.eq.s32.totalorder %s16, 0
      %p48 = por %p46, %p47
      %p49 = scmp.ne.s32.totalorder %s38, %s41
      %p50 = scmp.eq.s32.totalorder %s21, 1
      %p51 = por %p49, %p50
      %p52 = scmp.ne.s32.totalorder %s41, %s42
      %p53 = scmp.eq.s32.totalorder %s21, 0
      %p54 = por %p52, %p53
      %p55 = scmp.ne.s32.totalorder %s41, %s42
      %p56 = scmp.eq.s32.totalorder %s22, 1
      %p57 = por %p55, %p56
      %p59 = scmp.ne.s32.totalorder %s42, %s58
      %p60 = scmp.eq.s32.totalorder %s22, 0
      %p61 = por %p59, %p60
      %s62 = ssub.s32 %s24, %s31
      %p63 = scmp.eq.s32.totalorder %s62, 0
      %s65 = sadd.s32 %s64, 1
      %s66 = scalar_select %p63, %s64, %s65
      %p69 = pneg %p63
      %p70 = scmp.eq.s32.totalorder %s16, 1
      %p71 = por %p69, %p70
      %p72 = scmp.ne.s32.totalorder %s64, %s67
      %p73 = scmp.eq.s32.totalorder %s16, 0
      %p74 = por %p72, %p73
      %p75 = scmp.ne.s32.totalorder %s64, %s67
      %p76 = scmp.eq.s32.totalorder %s21, 1
      %p77 = por %p75, %p76
      %p78 = scmp.ne.s32.totalorder %s67, %s68
      %p79 = scmp.eq.s32.totalorder %s21, 0
      %p80 = por %p78, %p79
      %p81 = scmp.ne.s32.totalorder %s67, %s68
      %p82 = scmp.eq.s32.totalorder %s22, 1
      %p83 = por %p81, %p82
      %p85 = scmp.ne.s32.totalorder %s68, %s84
      %p86 = scmp.eq.s32.totalorder %s22, 0
      %p87 = por %p85, %p86
      %s88 = ssub.s32 %s24, %s31
      %p89 = scmp.eq.s32.totalorder %s88, 0
      %s91 = sadd.s32 %s90, 1
      %s92 = scalar_select %p89, %s90, %s91
      %p95 = pneg %p89
      %p96 = scmp.eq.s32.totalorder %s16, 1
      %p97 = por %p95, %p96
      %p98 = scmp.ne.s32.totalorder %s90, %s93
      %p99 = scmp.eq.s32.totalorder %s16, 0
      %p100 = por %p98, %p99
      %p101 = scmp.ne.s32.totalorder %s90, %s93
      %p102 = scmp.eq.s32.totalorder %s21, 1
      %p103 = por %p101, %p102
      %p104 = scmp.ne.s32.totalorder %s93, %s94
      %p105 = scmp.eq.s32.totalorder %s21, 0
      %p106 = por %p104, %p105
      %p107 = scmp.ne.s32.totalorder %s93, %s94
      %p108 = scmp.eq.s32.totalorder %s22, 1
      %p109 = por %p107, %p108
      %p111 = scmp.ne.s32.totalorder %s94, %s110
      %p112 = scmp.eq.s32.totalorder %s22, 0
      %p113 = por %p111, %p112
      %s114 = ssub.s32 %s23, %s35
      %s115 = ssub.s32 %s24, %s31
      %s116 = sor.u32 %s114, %s115
      %p117 = scmp.eq.s32.totalorder %s116, 0
      %s119 = sadd.s32 %s118, 1
      %s120 = scalar_select %p117, %s118, %s119
      %p123 = pneg %p117
      %p124 = scmp.eq.s32.totalorder %s16, 1
      %p125 = por %p123, %p124
      %p126 = scmp.ne.s32.totalorder %s118, %s121
      %p127 = scmp.eq.s32.totalorder %s16, 0
      %p128 = por %p126, %p127
      %p129 = scmp.ne.s32.totalorder %s118, %s121
      %p130 = scmp.eq.s32.totalorder %s21, 1
      %p131 = por %p129, %p130
      %p132 = scmp.ne.s32.totalorder %s121, %s122
      %p133 = scmp.eq.s32.totalorder %s21, 0
      %p134 = por %p132, %p133
      %p135 = scmp.ne.s32.totalorder %s121, %s122
      %p136 = scmp.eq.s32.totalorder %s22, 1
      %p137 = por %p135, %p136
      %p139 = scmp.ne.s32.totalorder %s122, %s138
      %p140 = scmp.eq.s32.totalorder %s22, 0
      %p141 = por %p139, %p140
      %p142 = scmp.le.s32.totalorder 1, %s16
      %p143 = scmp.lt.s32.totalorder %s16, 3
      %p144 = pnand %p142, %p143
      %p145 = pneg %p144
      // Predicated region
      $region9: #{tpu_custom_call.1} parent=5 // pred_check
        _
      $region10: #{tpu_custom_call.1} parent=5 // pred_check_branch
        %147 = sbr.rel (%p144) target = $region12
      $region11: #{tpu_custom_call.1} parent=5 // pred_region
        %s148 = ssub.s32 %s16, 1
        // Predicated region
        $region13: #{tpu_custom_call.1} parent=11 // pred_check
          %p149 = pneg %p80
        $region14: #{tpu_custom_call.1} parent=11 // pred_check_branch
          %151 = sbr.rel (%p149) target = $region16
        $region15: #{tpu_custom_call.1} parent=11 // pred_region
          %s153 = ssub.s32 512, 512
          %154 = vsyncadd [#allocation6], %s153
          %s155 = smul.addr %s26, 128
          %s156 = scalar_lea.hbm %s1, %s155
          %s157 = sshll.u32 [#allocation5], 4
          %s158 = int_to_ptr.vmem [resolvable:$true] %s157
          %163 = dma.hbm_to_vmem [thread:$0]  %s156, 512, %s158, [#allocation6], 128, 128, 8
        $region16: #{tpu_custom_call.1} parent=11 // pred_fallthru
          _
        // Predicated region
        $region17: #{tpu_custom_call.1} parent=11 // pred_check
          %p164 = pneg %p106
        $region18: #{tpu_custom_call.1} parent=11 // pred_check_branch
          %166 = sbr.rel (%p164) target = $region20
        $region19: #{tpu_custom_call.1} parent=11 // pred_region
          %p167 = scmp.lt.s32.totalorder %s26, 0
          %s168 = scalar_select %p167, %s26, 0
          %s169 = scalar_lea.vmem %s2, %s168
        $region20: #{tpu_custom_call.1} parent=11 // pred_fallthru
          _
      $region12: #{tpu_custom_call.1} parent=5 // pred_fallthru
        _
      %p170 = scmp.lt.s32.totalorder %s16, 2
      // Predicated region
      $region21: #{tpu_custom_call.1} parent=5 // pred_check
        %p171 = pneg %p170
      $region22: #{tpu_custom_call.1} parent=5 // pred_check_branch
        %173 = sbr.rel (%p171) target = $region24
      $region23: #{tpu_custom_call.1} parent=5 // pred_region
        // Predicated region
        $region25: #{tpu_custom_call.1} parent=23 // pred_check
          %p174 = pneg %p48
        $region26: #{tpu_custom_call.1} parent=23 // pred_check_branch
          %176 = sbr.rel (%p174) target = $region28
        $region27: #{tpu_custom_call.1} parent=23 // pred_region
          %s177 = sand.u32 %s38, 1
          %s178 = scalar_lea.sflag [#allocation3], %s177
          %s179 = sand.u32 %s38, 1
          %s180 = smul.addr %s179, 8
          %s181 = scalar_lea.vmem [#allocation2], %s180
          %s183 = ssub.s32 128, 128
          %184 = vsyncadd %s178, %s183
          %s185 = smul.addr %s23, 128
          %s186 = scalar_lea.hbm %s0, %s185
          %s188 = sshll.u32 %s181, 4
          %s189 = int_to_ptr.vmem [resolvable:$true] %s188
          %191 = dma.hbm_to_vmem [thread:$0]  %s186, 128, %s189, %s178
        $region28: #{tpu_custom_call.1} parent=23 // pred_fallthru
          _
      $region24: #{tpu_custom_call.1} parent=5 // pred_fallthru
        _
      %p192 = scmp.le.s32.totalorder 1, %s16
      %p193 = scmp.lt.s32.totalorder %s16, 3
      %p194 = pnand %p192, %p193
      %p195 = pneg %p194
      // Predicated region
      $region29: #{tpu_custom_call.1} parent=5 // pred_check
        _
      $region30: #{tpu_custom_call.1} parent=5 // pred_check_branch
        %197 = sbr.rel (%p194) target = $region32
      $region31: #{tpu_custom_call.1} parent=5 // pred_region
        %s198 = ssub.s32 %s16, 1
        %s199 = sand.u32 %s41, 1
        %s200 = scalar_lea.sflag [#allocation3], %s199
        %s201 = sand.u32 %s41, 1
        %s202 = smul.addr %s201, 8
        %s203 = scalar_lea.vmem [#allocation2], %s202
        // Predicated region
        $region33: #{tpu_custom_call.1} parent=31 // pred_check
          %p204 = pneg %p54
        $region34: #{tpu_custom_call.1} parent=31 // pred_check_branch
          %206 = sbr.rel (%p204) target = $region36
        $region35: #{tpu_custom_call.1} parent=31 // pred_region
          %207 = dma.done %s200, 128
        $region36: #{tpu_custom_call.1} parent=31 // pred_fallthru
          _
        // Predicated region
        $region37: #{tpu_custom_call.1} parent=31 // pred_check
          %p208 = pneg %p80
        $region38: #{tpu_custom_call.1} parent=31 // pred_check_branch
          %210 = sbr.rel (%p208) target = $region40
        $region39: #{tpu_custom_call.1} parent=31 // pred_region
          %211 = dma.done [#allocation6], 512
        $region40: #{tpu_custom_call.1} parent=31 // pred_fallthru
          _
        %s212 = sand.u32 %s41, 1
        %s213 = scalar_lea.sflag [#allocation3], %s212
        %s214 = sand.u32 %s41, 1
        %s215 = smul.addr %s214, 8
        %s216 = scalar_lea.vmem [#allocation2], %s215
        %p217 = pneg %p54
        %p218 = pneg %p51
        %p219 = pneg %p80
        %p220 = pneg %p77
        %p221 = scmp.lt.s32.totalorder %s26, 0
        %s222 = scalar_select %p221, %s26, 0
        %s223 = scalar_lea.vmem %s2, %s222
        %p224 = pneg %p106
        %p225 = pneg %p103
        %p226 = pneg %p134
        %p227 = pneg %p131
        %s228 = sand.u32 %s121, 1
        %s229 = scalar_lea.sflag [#allocation4], %s228
        %s230 = sand.u32 %s121, 1
        %s231 = smul.addr %s230, 8
        %s232 = scalar_lea.vmem [#allocation7], %s231
        %p233 = scmp.lt.s32.totalorder %s26, 0
        %s234 = scalar_select %p233, %s26, 0
        %s235 = scalar_lea.vmem %s2, %s234
        %v236 = vld [vmem:[%s203] sm:$0xff]
        %v237 = vld [vmem:[#allocation5] sm:$0xff]
        %v238 = vld [vmem:[#allocation5 + $0x8] sm:$0xff]
        %v239 = vld [vmem:[#allocation5 + $0x10] sm:$0xff]
        %v240 = vld [vmem:[#allocation5 + $0x18] sm:$0xff]
        %v241 = vld [vmem:[%s235] sm:$0x1]
        %v243 = vlaneseq
        %v244 = vshrl.u32 %v243, 7
        %v245 = vsub.s32 0, %v244
        %v246 = vrot.slane %v241, %v245
        %vm248 = vcmask 261120
        %v250 = vsel %vm248, %v236, 0
        %252 = vmatprep.subr.mxu0 0.0
        %v253 = vand.u32 %v237, 4294901760
        %254 = vmatpush1.msra.mxu0 %v253
        %255 = vmatprep.subr.mxu0 0.0
        %v256 = vand.u32 %v238, 4294901760
        %257 = vmatpush1.msra.mxu0 %v256
        %258 = vmatprep.subr.mxu0 0.0
        %v259 = vand.u32 %v239, 4294901760
        %260 = vmatpush1.msra.mxu0 %v259
        %261 = vmatprep.subr.mxu0 0.0
        %v262 = vand.u32 %v240, 4294901760
        %263 = vmatpush1.msra.mxu0 %v262
        %264 = vmatprep.subr.mxu0 0.0
        %265 = vmatpush1.msra.mxu0 0.0
        %266 = vmatprep.subr.mxu0 0.0
        %267 = vmatpush1.msra.mxu0 0.0
        %268 = vmatprep.subr.mxu0 0.0
        %269 = vmatpush1.msra.mxu0 0.0
        %270 = vmatprep.subr.mxu0 0.0
        %271 = vmatpush1.msra.mxu0 0.0
        %272 = vmatprep.subr.mxu0 0.0
        %273 = vmatpush1.msra.mxu0 0.0
        %274 = vmatprep.subr.mxu0 0.0
        %275 = vmatpush1.msra.mxu0 0.0
        %276 = vmatprep.subr.mxu0 0.0
        %277 = vmatpush1.msra.mxu0 0.0
        %278 = vmatprep.subr.mxu0 0.0
        %279 = vmatpush1.msra.mxu0 0.0
        %280 = vmatprep.subr.mxu0 0.0
        %281 = vmatpush1.msra.mxu0 0.0
        %282 = vmatprep.subr.mxu0 0.0
        %283 = vmatpush1.msra.mxu0 0.0
        %284 = vmatprep.subr.mxu0 0.0
        %285 = vmatpush1.msra.mxu0 0.0
        %286 = vmatprep.subr.mxu0 0.0
        %287 = vmatpush1.msra.mxu0 0.0
        %288 = vmatprep.subr.mxu0 0.0
        %289 = vmatpush1.msra.mxu0 0.0
        %290 = vmatprep.subr.mxu0 0.0
        %291 = vmatpush1.msra.mxu0 0.0
        %292 = vmatprep.subr.mxu0 0.0
        %293 = vmatpush1.msra.mxu0 0.0
        %294 = vmatprep.subr.mxu0 0.0
        %295 = vmatpush1.msra.mxu0 0.0
        %296 = vmatprep.subr.mxu0 0.0
        %297 = vmatpush1.msra.mxu0 0.0
        %298 = vmatprep.subr.mxu0 0.0
        %299 = vmatpush1.msra.mxu0 0.0
        %300 = vmatprep.subr.mxu0 0.0
        %301 = vmatpush1.msra.mxu0 0.0
        %302 = vmatprep.subr.mxu0 0.0
        %303 = vmatpush1.msra.mxu0 0.0
        %304 = vmatprep.subr.mxu0 0.0
        %305 = vmatpush1.msra.mxu0 0.0
        %306 = vmatprep.subr.mxu0 0.0
        %307 = vmatpush1.msra.mxu0 0.0
        %308 = vmatprep.subr.mxu0 0.0
        %309 = vmatpush1.msra.mxu0 0.0
        %310 = vmatprep.subr.mxu0 0.0
        %311 = vmatpush1.msra.mxu0 0.0
        %312 = vmatprep.subr.mxu0 0.0
        %313 = vmatpush1.msra.mxu0 0.0
        %314 = vmatprep.subr.mxu0 0.0
        %315 = vmatpush1.msra.mxu0 0.0
        %316 = vmatprep.subr.mxu0 0.0
        %317 = vmatpush1.msra.mxu0 0.0
        %318 = vmatprep.subr.mxu0 0.0
        %319 = vmatpush1.msra.mxu0 0.0
        %320 = vmatprep.mubr.f32.mxu0 0.0
        %v321 = vand.u32 %v250, 4294901760
        %v322 = vsub.f32 %v250, %v321
        %v323 = vand.u32 %v322, 4294901760
        %v324 = vsub.f32 %v322, %v323
        %v325 = vand.u32 %v324, 4294901760
        %326 = vmatmul.mubr.f32.gmra.mrb[0].mxu0 %v325
        %v327 = vpop.f32.mrb[0].mxu0
        %v328 = vadd.f32 %v246, %v327
        %v329 = vpop.f32.mrb[0].mxu0
        %330 = vdwg.mxu0
        %331 = vmatprep.subr.mxu0 0.0
        %v332 = vand.u32 %v237, 4294901760
        %v333 = vsub.f32 %v237, %v332
        %v334 = vand.u32 %v333, 4294901760
        %v335 = vsub.f32 %v333, %v334
        %v336 = vand.u32 %v335, 4294901760
        %337 = vmatpush1.msra.mxu0 %v336
        %338 = vmatprep.subr.mxu0 0.0
        %v339 = vand.u32 %v238, 4294901760
        %v340 = vsub.f32 %v238, %v339
        %v341 = vand.u32 %v340, 4294901760
        %v342 = vsub.f32 %v340, %v341
        %v343 = vand.u32 %v342, 4294901760
        %344 = vmatpush1.msra.mxu0 %v343
        %345 = vmatprep.subr.mxu0 0.0
        %v346 = vand.u32 %v239, 4294901760
        %v347 = vsub.f32 %v239, %v346
        %v348 = vand.u32 %v347, 4294901760
        %v349 = vsub.f32 %v347, %v348
        %v350 = vand.u32 %v349, 4294901760
        %351 = vmatpush1.msra.mxu0 %v350
        %352 = vmatprep.subr.mxu0 0.0
        %v353 = vand.u32 %v240, 4294901760
        %v354 = vsub.f32 %v240, %v353
        %v355 = vand.u32 %v354, 4294901760
        %v356 = vsub.f32 %v354, %v355
        %v357 = vand.u32 %v356, 4294901760
        %358 = vmatpush1.msra.mxu0 %v357
        %359 = vmatprep.subr.mxu0 0.0
        %360 = vmatpush1.msra.mxu0 0.0
        %361 = vmatprep.subr.mxu0 0.0
        %362 = vmatpush1.msra.mxu0 0.0
        %363 = vmatprep.subr.mxu0 0.0
        %364 = vmatpush1.msra.mxu0 0.0
        %365 = vmatprep.subr.mxu0 0.0
        %366 = vmatpush1.msra.mxu0 0.0
        %367 = vmatprep.subr.mxu0 0.0
        %368 = vmatpush1.msra.mxu0 0.0
        %369 = vmatprep.subr.mxu0 0.0
        %370 = vmatpush1.msra.mxu0 0.0
        %371 = vmatprep.subr.mxu0 0.0
        %372 = vmatpush1.msra.mxu0 0.0
        %373 = vmatprep.subr.mxu0 0.0
        %374 = vmatpush1.msra.mxu0 0.0
        %375 = vmatprep.subr.mxu0 0.0
        %376 = vmatpush1.msra.mxu0 0.0
        %377 = vmatprep.subr.mxu0 0.0
        %378 = vmatpush1.msra.mxu0 0.0
        %379 = vmatprep.subr.mxu0 0.0
        %380 = vmatpush1.msra.mxu0 0.0
        %381 = vmatprep.subr.mxu0 0.0
        %382 = vmatpush1.msra.mxu0 0.0
        %383 = vmatprep.subr.mxu0 0.0
        %384 = vmatpush1.msra.mxu0 0.0
        %385 = vmatprep.subr.mxu0 0.0
        %386 = vmatpush1.msra.mxu0 0.0
        %387 = vmatprep.subr.mxu0 0.0
        %388 = vmatpush1.msra.mxu0 0.0
        %389 = vmatprep.subr.mxu0 0.0
        %390 = vmatpush1.msra.mxu0 0.0
        %391 = vmatprep.subr.mxu0 0.0
        %392 = vmatpush1.msra.mxu0 0.0
        %393 = vmatprep.subr.mxu0 0.0
        %394 = vmatpush1.msra.mxu0 0.0
        %395 = vmatprep.subr.mxu0 0.0
        %396 = vmatpush1.msra.mxu0 0.0
        %397 = vmatprep.subr.mxu0 0.0
        %398 = vmatpush1.msra.mxu0 0.0
        %399 = vmatprep.subr.mxu0 0.0
        %400 = vmatpush1.msra.mxu0 0.0
        %401 = vmatprep.subr.mxu0 0.0
        %402 = vmatpush1.msra.mxu0 0.0
        %403 = vmatprep.subr.mxu0 0.0
        %404 = vmatpush1.msra.mxu0 0.0
        %405 = vmatprep.subr.mxu0 0.0
        %406 = vmatpush1.msra.mxu0 0.0
        %407 = vmatprep.subr.mxu0 0.0
        %408 = vmatpush1.msra.mxu0 0.0
        %409 = vmatprep.subr.mxu0 0.0
        %410 = vmatpush1.msra.mxu0 0.0
        %411 = vmatprep.subr.mxu0 0.0
        %412 = vmatpush1.msra.mxu0 0.0
        %413 = vmatprep.subr.mxu0 0.0
        %414 = vmatpush1.msra.mxu0 0.0
        %415 = vmatprep.mubr.f32.mxu0 0.0
        %v416 = vand.u32 %v250, 4294901760
        %417 = vmatmul.mubr.f32.gmra.mrb[0].mxu0 %v416
        %v418 = vpop.f32.mrb[0].mxu0
        %v419 = vadd.f32 %v328, %v418
        %v420 = vpop.f32.mrb[0].mxu0
        %421 = vdwg.mxu0
        %422 = vmatprep.subr.mxu0 0.0
        %v423 = vand.u32 %v237, 4294901760
        %v424 = vsub.f32 %v237, %v423
        %425 = vmatpush1.msra.mxu0 %v424
        %426 = vmatprep.subr.mxu0 0.0
        %v427 = vand.u32 %v238, 4294901760
        %v428 = vsub.f32 %v238, %v427
        %429 = vmatpush1.msra.mxu0 %v428
        %430 = vmatprep.subr.mxu0 0.0
        %v431 = vand.u32 %v239, 4294901760
        %v432 = vsub.f32 %v239, %v431
        %433 = vmatpush1.msra.mxu0 %v432
        %434 = vmatprep.subr.mxu0 0.0
        %v435 = vand.u32 %v240, 4294901760
        %v436 = vsub.f32 %v240, %v435
        %437 = vmatpush1.msra.mxu0 %v436
        %438 = vmatprep.subr.mxu0 0.0
        %439 = vmatpush1.msra.mxu0 0.0
        %440 = vmatprep.subr.mxu0 0.0
        %441 = vmatpush1.msra.mxu0 0.0
        %442 = vmatprep.subr.mxu0 0.0
        %443 = vmatpush1.msra.mxu0 0.0
        %444 = vmatprep.subr.mxu0 0.0
        %445 = vmatpush1.msra.mxu0 0.0
        %446 = vmatprep.subr.mxu0 0.0
        %447 = vmatpush1.msra.mxu0 0.0
        %448 = vmatprep.subr.mxu0 0.0
        %449 = vmatpush1.msra.mxu0 0.0
        %450 = vmatprep.subr.mxu0 0.0
        %451 = vmatpush1.msra.mxu0 0.0
        %452 = vmatprep.subr.mxu0 0.0
        %453 = vmatpush1.msra.mxu0 0.0
        %454 = vmatprep.subr.mxu0 0.0
        %455 = vmatpush1.msra.mxu0 0.0
        %456 = vmatprep.subr.mxu0 0.0
        %457 = vmatpush1.msra.mxu0 0.0
        %458 = vmatprep.subr.mxu0 0.0
        %459 = vmatpush1.msra.mxu0 0.0
        %460 = vmatprep.subr.mxu0 0.0
        %461 = vmatpush1.msra.mxu0 0.0
        %462 = vmatprep.subr.mxu0 0.0
        %463 = vmatpush1.msra.mxu0 0.0
        %464 = vmatprep.subr.mxu0 0.0
        %465 = vmatpush1.msra.mxu0 0.0
        %466 = vmatprep.subr.mxu0 0.0
        %467 = vmatpush1.msra.mxu0 0.0
        %468 = vmatprep.subr.mxu0 0.0
        %469 = vmatpush1.msra.mxu0 0.0
        %470 = vmatprep.subr.mxu0 0.0
        %471 = vmatpush1.msra.mxu0 0.0
        %472 = vmatprep.subr.mxu0 0.0
        %473 = vmatpush1.msra.mxu0 0.0
        %474 = vmatprep.subr.mxu0 0.0
        %475 = vmatpush1.msra.mxu0 0.0
        %476 = vmatprep.subr.mxu0 0.0
        %477 = vmatpush1.msra.mxu0 0.0
        %478 = vmatprep.subr.mxu0 0.0
        %479 = vmatpush1.msra.mxu0 0.0
        %480 = vmatprep.subr.mxu0 0.0
        %481 = vmatpush1.msra.mxu0 0.0
        %482 = vmatprep.subr.mxu0 0.0
        %483 = vmatpush1.msra.mxu0 0.0
        %484 = vmatprep.subr.mxu0 0.0
        %485 = vmatpush1.msra.mxu0 0.0
        %486 = vmatprep.subr.mxu0 0.0
        %487 = vmatpush1.msra.mxu0 0.0
        %488 = vmatprep.subr.mxu0 0.0
        %489 = vmatpush1.msra.mxu0 0.0
        %490 = vmatprep.subr.mxu0 0.0
        %491 = vmatpush1.msra.mxu0 0.0
        %492 = vmatprep.subr.mxu0 0.0
        %493 = vmatpush1.msra.mxu0 0.0
        %494 = vmatprep.mubr.f32.mxu0 0.0
        %v495 = vand.u32 %v250, 4294901760
        %v496 = vsub.f32 %v250, %v495
        %497 = vmatmul.mubr.f32.gmra.mrb[0].mxu0 %v496
        %v498 = vpop.f32.mrb[0].mxu0
        %v499 = vadd.f32 %v419, %v498
        %v500 = vpop.f32.mrb[0].mxu0
        %501 = vdwg.mxu0
        %502 = vmatprep.subr.mxu0 0.0
        %v503 = vand.u32 %v237, 4294901760
        %504 = vmatpush1.msra.mxu0 %v503
        %505 = vmatprep.subr.mxu0 0.0
        %v506 = vand.u32 %v238, 4294901760
        %507 = vmatpush1.msra.mxu0 %v506
        %508 = vmatprep.subr.mxu0 0.0
        %v509 = vand.u32 %v239, 4294901760
        %510 = vmatpush1.msra.mxu0 %v509
        %511 = vmatprep.subr.mxu0 0.0
        %v512 = vand.u32 %v240, 4294901760
        %513 = vmatpush1.msra.mxu0 %v512
        %514 = vmatprep.subr.mxu0 0.0
        %515 = vmatpush1.msra.mxu0 0.0
        %516 = vmatprep.subr.mxu0 0.0
        %517 = vmatpush1.msra.mxu0 0.0
        %518 = vmatprep.subr.mxu0 0.0
        %519 = vmatpush1.msra.mxu0 0.0
        %520 = vmatprep.subr.mxu0 0.0
        %521 = vmatpush1.msra.mxu0 0.0
        %522 = vmatprep.subr.mxu0 0.0
        %523 = vmatpush1.msra.mxu0 0.0
        %524 = vmatprep.subr.mxu0 0.0
        %525 = vmatpush1.msra.mxu0 0.0
        %526 = vmatprep.subr.mxu0 0.0
        %527 = vmatpush1.msra.mxu0 0.0
        %528 = vmatprep.subr.mxu0 0.0
        %529 = vmatpush1.msra.mxu0 0.0
        %530 = vmatprep.subr.mxu0 0.0
        %531 = vmatpush1.msra.mxu0 0.0
        %532 = vmatprep.subr.mxu0 0.0
        %533 = vmatpush1.msra.mxu0 0.0
        %534 = vmatprep.subr.mxu0 0.0
        %535 = vmatpush1.msra.mxu0 0.0
        %536 = vmatprep.subr.mxu0 0.0
        %537 = vmatpush1.msra.mxu0 0.0
        %538 = vmatprep.subr.mxu0 0.0
        %539 = vmatpush1.msra.mxu0 0.0
        %540 = vmatprep.subr.mxu0 0.0
        %541 = vmatpush1.msra.mxu0 0.0
        %542 = vmatprep.subr.mxu0 0.0
        %543 = vmatpush1.msra.mxu0 0.0
        %544 = vmatprep.subr.mxu0 0.0
        %545 = vmatpush1.msra.mxu0 0.0
        %546 = vmatprep.subr.mxu0 0.0
        %547 = vmatpush1.msra.mxu0 0.0
        %548 = vmatprep.subr.mxu0 0.0
        %549 = vmatpush1.msra.mxu0 0.0
        %550 = vmatprep.subr.mxu0 0.0
        %551 = vmatpush1.msra.mxu0 0.0
        %552 = vmatprep.subr.mxu0 0.0
        %553 = vmatpush1.msra.mxu0 0.0
        %554 = vmatprep.subr.mxu0 0.0
        %555 = vmatpush1.msra.mxu0 0.0
        %556 = vmatprep.subr.mxu0 0.0
        %557 = vmatpush1.msra.mxu0 0.0
        %558 = vmatprep.subr.mxu0 0.0
        %559 = vmatpush1.msra.mxu0 0.0
        %560 = vmatprep.subr.mxu0 0.0
        %561 = vmatpush1.msra.mxu0 0.0
        %562 = vmatprep.subr.mxu0 0.0
        %563 = vmatpush1.msra.mxu0 0.0
        %564 = vmatprep.subr.mxu0 0.0
        %565 = vmatpush1.msra.mxu0 0.0
        %566 = vmatprep.subr.mxu0 0.0
        %567 = vmatpush1.msra.mxu0 0.0
        %568 = vmatprep.subr.mxu0 0.0
        %569 = vmatpush1.msra.mxu0 0.0
        %570 = vmatprep.mubr.f32.mxu0 0.0
        %v571 = vand.u32 %v250, 4294901760
        %v572 = vsub.f32 %v250, %v571
        %v573 = vand.u32 %v572, 4294901760
        %574 = vmatmul.mubr.f32.gmra.mrb[0].mxu0 %v573
        %v575 = vpop.f32.mrb[0].mxu0
        %v576 = vadd.f32 %v499, %v575
        %v577 = vpop.f32.mrb[0].mxu0
        %578 = vdwg.mxu0
        %579 = vmatprep.subr.mxu0 0.0
        %v580 = vand.u32 %v237, 4294901760
        %v581 = vsub.f32 %v237, %v580
        %v582 = vand.u32 %v581, 4294901760
        %583 = vmatpush1.msra.mxu0 %v582
        %584 = vmatprep.subr.mxu0 0.0
        %v585 = vand.u32 %v238, 4294901760
        %v586 = vsub.f32 %v238, %v585
        %v587 = vand.u32 %v586, 4294901760
        %588 = vmatpush1.msra.mxu0 %v587
        %589 = vmatprep.subr.mxu0 0.0
        %v590 = vand.u32 %v239, 4294901760
        %v591 = vsub.f32 %v239, %v590
        %v592 = vand.u32 %v591, 4294901760
        %593 = vmatpush1.msra.mxu0 %v592
        %594 = vmatprep.subr.mxu0 0.0
        %v595 = vand.u32 %v240, 4294901760
        %v596 = vsub.f32 %v240, %v595
        %v597 = vand.u32 %v596, 4294901760
        %598 = vmatpush1.msra.mxu0 %v597
        %599 = vmatprep.subr.mxu0 0.0
        %600 = vmatpush1.msra.mxu0 0.0
        %601 = vmatprep.subr.mxu0 0.0
        %602 = vmatpush1.msra.mxu0 0.0
        %603 = vmatprep.subr.mxu0 0.0
        %604 = vmatpush1.msra.mxu0 0.0
        %605 = vmatprep.subr.mxu0 0.0
        %606 = vmatpush1.msra.mxu0 0.0
        %607 = vmatprep.subr.mxu0 0.0
        %608 = vmatpush1.msra.mxu0 0.0
        %609 = vmatprep.subr.mxu0 0.0
        %610 = vmatpush1.msra.mxu0 0.0
        %611 = vmatprep.subr.mxu0 0.0
        %612 = vmatpush1.msra.mxu0 0.0
        %613 = vmatprep.subr.mxu0 0.0
        %614 = vmatpush1.msra.mxu0 0.0
        %615 = vmatprep.subr.mxu0 0.0
        %616 = vmatpush1.msra.mxu0 0.0
        %617 = vmatprep.subr.mxu0 0.0
        %618 = vmatpush1.msra.mxu0 0.0
        %619 = vmatprep.subr.mxu0 0.0
        %620 = vmatpush1.msra.mxu0 0.0
        %621 = vmatprep.subr.mxu0 0.0
        %622 = vmatpush1.msra.mxu0 0.0
        %623 = vmatprep.subr.mxu0 0.0
        %624 = vmatpush1.msra.mxu0 0.0
        %625 = vmatprep.subr.mxu0 0.0
        %626 = vmatpush1.msra.mxu0 0.0
        %627 = vmatprep.subr.mxu0 0.0
        %628 = vmatpush1.msra.mxu0 0.0
        %629 = vmatprep.subr.mxu0 0.0
        %630 = vmatpush1.msra.mxu0 0.0
        %631 = vmatprep.subr.mxu0 0.0
        %632 = vmatpush1.msra.mxu0 0.0
        %633 = vmatprep.subr.mxu0 0.0
        %634 = vmatpush1.msra.mxu0 0.0
        %635 = vmatprep.subr.mxu0 0.0
        %636 = vmatpush1.msra.mxu0 0.0
        %637 = vmatprep.subr.mxu0 0.0
        %638 = vmatpush1.msra.mxu0 0.0
        %639 = vmatprep.subr.mxu0 0.0
        %640 = vmatpush1.msra.mxu0 0.0
        %641 = vmatprep.subr.mxu0 0.0
        %642 = vmatpush1.msra.mxu0 0.0
        %643 = vmatprep.subr.mxu0 0.0
        %644 = vmatpush1.msra.mxu0 0.0
        %645 = vmatprep.subr.mxu0 0.0
        %646 = vmatpush1.msra.mxu0 0.0
        %647 = vmatprep.subr.mxu0 0.0
        %648 = vmatpush1.msra.mxu0 0.0
        %649 = vmatprep.subr.mxu0 0.0
        %650 = vmatpush1.msra.mxu0 0.0
        %651 = vmatprep.subr.mxu0 0.0
        %652 = vmatpush1.msra.mxu0 0.0
        %653 = vmatprep.subr.mxu0 0.0
        %654 = vmatpush1.msra.mxu0 0.0
        %655 = vmatprep.mubr.f32.mxu0 0.0
        %v656 = vand.u32 %v250, 4294901760
        %657 = vmatmul.mubr.f32.gmra.mrb[0].mxu0 %v656
        %v658 = vpop.f32.mrb[0].mxu0
        %v659 = vadd.f32 %v576, %v658
        %v660 = vpop.f32.mrb[0].mxu0
        %661 = vdwg.mxu0
        %662 = vmatprep.subr.mxu0 0.0
        %v663 = vand.u32 %v237, 4294901760
        %664 = vmatpush1.msra.mxu0 %v663
        %665 = vmatprep.subr.mxu0 0.0
        %v666 = vand.u32 %v238, 4294901760
        %667 = vmatpush1.msra.mxu0 %v666
        %668 = vmatprep.subr.mxu0 0.0
        %v669 = vand.u32 %v239, 4294901760
        %670 = vmatpush1.msra.mxu0 %v669
        %671 = vmatprep.subr.mxu0 0.0
        %v672 = vand.u32 %v240, 4294901760
        %673 = vmatpush1.msra.mxu0 %v672
        %674 = vmatprep.subr.mxu0 0.0
        %675 = vmatpush1.msra.mxu0 0.0
        %676 = vmatprep.subr.mxu0 0.0
        %677 = vmatpush1.msra.mxu0 0.0
        %678 = vmatprep.subr.mxu0 0.0
        %679 = vmatpush1.msra.mxu0 0.0
        %680 = vmatprep.subr.mxu0 0.0
        %681 = vmatpush1.msra.mxu0 0.0
        %682 = vmatprep.subr.mxu0 0.0
        %683 = vmatpush1.msra.mxu0 0.0
        %684 = vmatprep.subr.mxu0 0.0
        %685 = vmatpush1.msra.mxu0 0.0
        %686 = vmatprep.subr.mxu0 0.0
        %687 = vmatpush1.msra.mxu0 0.0
        %688 = vmatprep.subr.mxu0 0.0
        %689 = vmatpush1.msra.mxu0 0.0
        %690 = vmatprep.subr.mxu0 0.0
        %691 = vmatpush1.msra.mxu0 0.0
        %692 = vmatprep.subr.mxu0 0.0
        %693 = vmatpush1.msra.mxu0 0.0
        %694 = vmatprep.subr.mxu0 0.0
        %695 = vmatpush1.msra.mxu0 0.0
        %696 = vmatprep.subr.mxu0 0.0
        %697 = vmatpush1.msra.mxu0 0.0
        %698 = vmatprep.subr.mxu0 0.0
        %699 = vmatpush1.msra.mxu0 0.0
        %700 = vmatprep.subr.mxu0 0.0
        %701 = vmatpush1.msra.mxu0 0.0
        %702 = vmatprep.subr.mxu0 0.0
        %703 = vmatpush1.msra.mxu0 0.0
        %704 = vmatprep.subr.mxu0 0.0
        %705 = vmatpush1.msra.mxu0 0.0
        %706 = vmatprep.subr.mxu0 0.0
        %707 = vmatpush1.msra.mxu0 0.0
        %708 = vmatprep.subr.mxu0 0.0
        %709 = vmatpush1.msra.mxu0 0.0
        %710 = vmatprep.subr.mxu0 0.0
        %711 = vmatpush1.msra.mxu0 0.0
        %712 = vmatprep.subr.mxu0 0.0
        %713 = vmatpush1.msra.mxu0 0.0
        %714 = vmatprep.subr.mxu0 0.0
        %715 = vmatpush1.msra.mxu0 0.0
        %716 = vmatprep.subr.mxu0 0.0
        %717 = vmatpush1.msra.mxu0 0.0
        %718 = vmatprep.subr.mxu0 0.0
        %719 = vmatpush1.msra.mxu0 0.0
        %720 = vmatprep.subr.mxu0 0.0
        %721 = vmatpush1.msra.mxu0 0.0
        %722 = vmatprep.subr.mxu0 0.0
        %723 = vmatpush1.msra.mxu0 0.0
        %724 = vmatprep.subr.mxu0 0.0
        %725 = vmatpush1.msra.mxu0 0.0
        %726 = vmatprep.subr.mxu0 0.0
        %727 = vmatpush1.msra.mxu0 0.0
        %728 = vmatprep.subr.mxu0 0.0
        %729 = vmatpush1.msra.mxu0 0.0
        %730 = vmatprep.mubr.f32.mxu0 0.0
        %v731 = vand.u32 %v250, 4294901760
        %732 = vmatmul.mubr.f32.gmra.mrb[0].mxu0 %v731
        %v733 = vpop.f32.mrb[0].mxu0
        %v734 = vadd.f32 %v659, %v733
        %v735 = vpop.f32.mrb[0].mxu0
        %736 = vdwg.mxu0
        %v737 = vmax.f32 %v734, 0.0
        %vm738 = vcmask 523264
        %739 = vst.msk [vmem:[%s232] sm:$0xff] %vm738, %v737
        %s740 = sand.u32 %s121, 1
        %s741 = scalar_lea.sflag [#allocation4], %s740
        %s742 = sand.u32 %s121, 1
        %s743 = smul.addr %s742, 8
        %s744 = scalar_lea.vmem [#allocation7], %s743
        // Predicated region
        $region41: #{tpu_custom_call.1} parent=31 // pred_check
          %p745 = pneg %p131
        $region42: #{tpu_custom_call.1} parent=31 // pred_check_branch
          %747 = sbr.rel (%p745) target = $region44
        $region43: #{tpu_custom_call.1} parent=31 // pred_region
          %s749 = ssub.s32 128, 128
          %750 = vsyncadd %s741, %s749
          %s751 = sadd.s32 %s26, %s25
          %s752 = smul.addr %s751, 128
          %s753 = scalar_lea.hbm %s3, %s752
          %s755 = sshll.u32 %s744, 4
          %s756 = int_to_ptr.vmem [resolvable:$true] %s755
          %758 = dma.vmem_to_hbm [thread:$0]  %s756, 128, %s753, %s741
        $region44: #{tpu_custom_call.1} parent=31 // pred_fallthru
          _
      $region32: #{tpu_custom_call.1} parent=5 // pred_fallthru
        _
      %p759 = scmp.le.s32.totalorder 2, %s16
      // Predicated region
      $region45: #{tpu_custom_call.1} parent=5 // pred_check
        %p760 = pneg %p759
      $region46: #{tpu_custom_call.1} parent=5 // pred_check_branch
        %762 = sbr.rel (%p760) target = $region48
      $region47: #{tpu_custom_call.1} parent=5 // pred_region
        %s763 = ssub.s32 %s16, 2
        // Predicated region
        $region49: #{tpu_custom_call.1} parent=47 // pred_check
          %p764 = pneg %p137
        $region50: #{tpu_custom_call.1} parent=47 // pred_check_branch
          %766 = sbr.rel (%p764) target = $region52
        $region51: #{tpu_custom_call.1} parent=47 // pred_region
          %s767 = sand.u32 %s122, 1
          %s768 = scalar_lea.sflag [#allocation4], %s767
          %s769 = sand.u32 %s122, 1
          %s770 = smul.addr %s769, 8
          %s771 = scalar_lea.vmem [#allocation7], %s770
          %772 = dma.done %s768, 128
        $region52: #{tpu_custom_call.1} parent=47 // pred_fallthru
          _
      $region48: #{tpu_custom_call.1} parent=5 // pred_fallthru
        _
    $region6: #{tpu_custom_call.1} parent=1 // loop_footer
      %s20 = sadd.s32 1, %s16
    $region7: #{tpu_custom_call.1} parent=1 // loop_footer_branch
      %15 = sbr.rel target = $region3
    $region8: #{tpu_custom_call.1} parent=1 // loop_exit
      _
    %773 = vsyncpa [#allocation3], 1
    %s774 = scalar_lea.sflag [#allocation3], 1
    %775 = vsyncpa %s774, 1
    %776 = vsyncpa [#allocation6], 1
    %777 = vsyncpa [#allocation4], 1
    %s778 = scalar_lea.sflag [#allocation4], 1
    %779 = vsyncpa %s778, 1

</llo_original>
